<compile_context>
chip_gen: v7x
topology: tpu7x:2x2x1
jax: 0.10.0
libtpu: 0.0.40
codegen_flags: <defaults>
</compile_context>

<pallas_src>
import functools

import jax
import jax.numpy as jnp
from jax import lax
from jax.experimental import pallas as pl
from jax.experimental.pallas import tpu as pltpu

_LANE = 128
_SUBLANE = 8
_D_SLAB = 512                      # rows per f32 accumulation slab in the norm
_DEFAULT_VMEM_LIMIT = 48 * 1024 * 1024   # safe on v5e/v6e (128 MiB) and v7x (64 MiB)
_TILE_BUDGET_FRAC = 0.7            # tiles sized to ~70% of the limit (headroom for temps)


def _cdiv(a, b):
    return -(-a // b)


def _round_up(x, n):
    return _cdiv(x, n) * n


def _choose_tiles(B, D, C, cbytes, obytes, budget, tb, tc):
    """Pick (tb, tc): minimal padding, lane-dense classes, batch resident if it fits."""
    if tb is None:
        b_full = _round_up(B, _SUBLANE)
        # Largest batch tile whose double-buffered embedding slab stays within
        # ~1/3 of the budget; whole batch resident when possible (nb == 1).
        tb_cap = max(_SUBLANE, ((budget // 3) // max(1, 2 * D * cbytes)) // _SUBLANE * _SUBLANE)
        if b_full <= tb_cap:
            tb = b_full
        else:
            nb = _cdiv(B, tb_cap)
            tb = _round_up(_cdiv(B, nb), _SUBLANE)      # minimize batch padding
    else:
        tb = _round_up(tb, _SUBLANE)

    if tc is None:
        c_blocks = _cdiv(C, _LANE)
        # Per-128-column cost of the double-buffered weight + output tiles.
        per_blk = _LANE * (2 * D * cbytes + 2 * tb * obytes)
        rest = max(per_blk, budget - 2 * tb * D * cbytes - 2 * tb * _LANE * 4)
        cap_blocks = max(1, min(rest // per_blk, 16))   # cap tc at 2048 lanes
        nc = _cdiv(c_blocks, cap_blocks)
        if nc == 1 and c_blocks >= 2:
            nc = 2                                      # keep both v7x TCs busy
        tc = _cdiv(c_blocks, nc) * _LANE                # minimize class padding
    else:
        tc = _round_up(tc, _LANE)

    return tb, tc


def _amsoftmax_kernel(emb_ref, ker_ref, lab_ref, out_ref, scale_ref, col_ref,
                      *, m, s, tc, d_slab):
    """Writes one (TB, TC) tile of s * (clip(cos_theta) - m * one_hot(label))."""
    j = pl.program_id(0)   # class-tile index (outer, "parallel")
    i = pl.program_id(1)   # batch-tile index (inner, "arbitrary")

    # Per-class-tile constants: computed once (first batch tile) and cached in
    # VMEM scratch across all batch tiles of this class tile.
    @pl.when(i == 0)
    def _():
        # Column L2 norms, accumulated in f32 over sublane-aligned D-slabs so
        # a bf16 weight tile never needs a full (D, TC) f32 upcast temporary.
        D = ker_ref.shape[0]
        sq = jnp.zeros((1, tc), jnp.float32)
        d0 = 0
        while d0 < D:                                    # static trip count
            dd = min(d_slab, D - d0)
            w = ker_ref[pl.ds(d0, dd), :].astype(jnp.float32)
            sq = sq + jnp.sum(w * w, axis=0, keepdims=True)
            d0 += dd
        # Fold the output scale `s` into the cached per-column factor.
        # eps-guard so an all-zero (padding) column can't produce inf/NaN.
        scale_ref[...] = s * lax.rsqrt(jnp.maximum(sq, 1e-24))
        # Global column ids of this class tile (cached across batch tiles).
        col_ref[...] = lax.broadcasted_iota(jnp.int32, (1, tc), 1) + j * tc

    # s * cos_theta with the column normalization folded into the MXU output
    # (one scale-mul of the (TB, TC) result instead of dividing the weight tile).
    z = jnp.dot(emb_ref[...], ker_ref[...], preferred_element_type=jnp.float32)
    z = z * scale_ref[...]
    lim = abs(s)
    z = jnp.clip(z, -lim, lim)          # == s * clamp(cos_theta, -1, 1)

    # Margin only at the label column: s*(cos - m) == s*cos - s*m.
    labels = lab_ref[...]               # (TB, 1) int32
    # TODO(synk): labels outside [0, C) (e.g. ignore_index = -1, used for the
    # padded rows) simply get no margin here; PyTorch's scatter_ would raise.
    out = jnp.where(col_ref[...] == labels, z - s * m, z)
    out_ref[...] = out.astype(out_ref.dtype)


def am_softmax_head(embeddings, kernel, labels, *, m=0.35, s=30.0,
                    compute_dtype=None, out_dtype=jnp.float32,
                    tb=None, tc=None, weight_buffers=2,
                    vmem_limit_bytes=_DEFAULT_VMEM_LIMIT):
    """embeddings: (B, D); kernel: (D, C); labels: (B,) int -> (B, C) logits.

    compute_dtype: MXU/HBM dtype for emb & W (default: embeddings.dtype; pass
        jnp.bfloat16 to halve the dominant W stream and use the fast MXU path).
    out_dtype: logits dtype (jnp.bfloat16 halves the output writeback).
    weight_buffers: >2 deepens the weight-tile pipeline (useful on v5e where
        the per-class-tile W DMA has little compute to hide behind).
    """
    B, D = embeddings.shape
    Dk, C = kernel.shape
    assert D == Dk, (D, Dk)

    if compute_dtype is None:
        compute_dtype = embeddings.dtype
    cbytes = jnp.dtype(compute_dtype).itemsize
    obytes = jnp.dtype(out_dtype).itemsize

    budget = int(vmem_limit_bytes * _TILE_BUDGET_FRAC)
    tb, tc = _choose_tiles(B, D, C, cbytes, obytes, budget, tb, tc)

    nb, nc = _cdiv(B, tb), _cdiv(C, tc)
    Bp, Cp = nb * tb, nc * tc

    # Cast outside the kernel: W/emb stream from HBM already at compute_dtype.
    # (For repeated small-batch inference, cache `kernel.astype(bf16)` — and
    # ideally its column norms — outside this call so neither is redone per call.)
    emb = embeddings.astype(compute_dtype)
    ker = kernel.astype(compute_dtype)
    lab = labels.reshape(B, 1).astype(jnp.int32)
    if Bp != B:
        emb = jnp.pad(emb, ((0, Bp - B), (0, 0)))
        lab = jnp.pad(lab, ((0, Bp - B), (0, 0)), constant_values=-1)
    if Cp != C:
        # Padded zero columns: eps-guarded norm, cos stays 0, sliced off below.
        ker = jnp.pad(ker, ((0, 0), (0, Cp - C)))

    w_kwargs = {}
    if weight_buffers is not None and weight_buffers != 2:
        w_kwargs = dict(pipeline_mode=pl.Buffered(int(weight_buffers)))
    w_spec = pl.BlockSpec((D, tc), lambda j, i: (0, j), **w_kwargs)

    out = pl.pallas_call(
        functools.partial(_amsoftmax_kernel, m=float(m), s=float(s),
                          tc=tc, d_slab=_D_SLAB),
        out_shape=jax.ShapeDtypeStruct((Bp, Cp), out_dtype),
        grid_spec=pltpu.PrefetchScalarGridSpec(
            num_scalar_prefetch=0,
            # Class tiles outer, batch tiles inner: weight tile index (0, j) is
            # constant across the inner axis -> each (D, TC) W tile DMA'd once.
            # With nb == 1 (batch resident) emb/labels are DMA'd once total too.
            grid=(nc, nb),
            in_specs=[
                pl.BlockSpec((tb, D), lambda j, i: (i, 0)),   # embeddings
                w_spec,                                       # weight tile
                pl.BlockSpec((tb, 1), lambda j, i: (i, 0)),   # labels
            ],
            out_specs=pl.BlockSpec((tb, tc), lambda j, i: (i, j)),
            scratch_shapes=[
                pltpu.VMEM((1, tc), jnp.float32),   # cached s / ||w_col||
                pltpu.VMEM((1, tc), jnp.int32),     # cached global column ids
            ],
        ),
        compiler_params=pltpu.CompilerParams(
            # Class-tile axis is fully independent -> megacore-shardable (v7x).
            # Batch axis stays "arbitrary": the scratches are filled at i == 0
            # and reused across the batch tiles of a class tile.
            dimension_semantics=("parallel", "arbitrary"),
            vmem_limit_bytes=int(vmem_limit_bytes)),
    )(emb, ker, lab)

    return out[:B, :C]


def _reference(embeddings, kernel, labels, m=0.35, s=30.0):
    ker_n = kernel / jnp.linalg.norm(kernel, axis=0, keepdims=True)
    cos = jnp.clip(embeddings @ ker_n, -1.0, 1.0)
    one_hot = jax.nn.one_hot(labels, kernel.shape[1], dtype=jnp.bool_)
    return jnp.where(one_hot, cos - m, cos) * s


if __name__ == "__main__":
    # Small shapes consistent with the module: in_features=32, out_features=256,
    # batch=16.
    B, D, C = 16, 32, 256
    key = jax.random.PRNGKey(0)
    k_emb, k_w, k_lab = jax.random.split(key, 3)

    embeddings = jax.random.normal(k_emb, (B, D), dtype=jnp.float32)
    # Deterministic init mimicking uniform_(-1, 1); forward renormalizes anyway.
    kernel = jax.random.uniform(k_w, (D, C), dtype=jnp.float32, minval=-1.0, maxval=1.0)
    labels = jax.random.randint(k_lab, (B,), 0, C, dtype=jnp.int32)

    # (a) f32 path, auto-selected tiles: whole batch resident (nb=1), nc=2
    #     (exercises the class-tile column offset and megacore-friendly split).
    out = am_softmax_head(embeddings, kernel, labels)
    out = jax.block_until_ready(out)
    ref = _reference(embeddings, kernel, labels)
    assert out.shape == (B, C), out.shape
    assert jnp.allclose(out, ref, atol=1e-4, rtol=1e-4), "f32 path mismatch vs reference"

    # (b) bf16 MXU + bf16 logits path with explicit small tiles (nb=2, nc=2),
    #     exercising the cached-norm / cached-col-id reuse across batch tiles.
    out_bf = am_softmax_head(embeddings, kernel, labels,
                             compute_dtype=jnp.bfloat16, out_dtype=jnp.bfloat16,
                             tb=8, tc=128)
    out_bf = jax.block_until_ready(out_bf).astype(jnp.float32)
    ref_bf = _reference(embeddings.astype(jnp.bfloat16).astype(jnp.float32),
                        kernel.astype(jnp.bfloat16).astype(jnp.float32), labels)
    assert out_bf.shape == (B, C), out_bf.shape
    assert jnp.allclose(out_bf, ref_bf, atol=0.4, rtol=0.02), "bf16 path mismatch vs reference"

    print("KERNEL_OK")
</pallas_src>

<mosaic_0001>
module attributes {stable_mosaic.version = 11 : i64} {
  func.func @_amsoftmax_kernel(%arg0: i32, %arg1: i32, %arg2: memref<16x32xf32, #tpu.memory_space<vmem>>, %arg3: memref<32x128xf32, #tpu.memory_space<vmem>>, %arg4: memref<16x1xi32, #tpu.memory_space<vmem>>, %arg5: memref<16x128xf32, #tpu.memory_space<vmem>>, %arg6: memref<1x128xf32, #tpu.memory_space<vmem>>, %arg7: memref<1x128xi32, #tpu.memory_space<vmem>>) attributes {dimension_semantics = [#tpu.dimension_semantics<parallel>, #tpu.dimension_semantics<arbitrary>], iteration_bounds = array<i64: 2, 1>, scalar_prefetch = 0 : i64, scratch_operands = 2 : i64, tpu.core_type = #tpu.core_type<tc>, window_params = [{transform_indices = @transform_0, window_bounds = array<i64: 16, 32>}, {transform_indices = @transform_1, window_bounds = array<i64: 32, 128>}, {transform_indices = @transform_2, window_bounds = array<i64: 16, 1>}, {transform_indices = @transform_3, window_bounds = array<i64: 16, 128>}]} {
    %c0_i32 = arith.constant 0 : i32
    %0 = arith.cmpi eq, %arg1, %c0_i32 : i32
    %1 = arith.extui %0 : i1 to i32
    %c0_i32_0 = arith.constant 0 : i32
    %2 = arith.cmpi ne, %1, %c0_i32_0 : i32
    scf.if %2 {
      %cst_15 = arith.constant 0.000000e+00 : f32
      %22 = vector.broadcast %cst_15 : f32 to vector<1x128xf32>
      %c0_16 = arith.constant 0 : index
      %c0_17 = arith.constant 0 : index
      %23 = vector.load %arg3[%c0_16, %c0_17] : memref<32x128xf32, #tpu.memory_space<vmem>>, vector<32x128xf32>
      %24 = arith.mulf %23, %23 : vector<32x128xf32>
      %cst_18 = arith.constant dense<0.000000e+00> : vector<128xf32>
      %25 = vector.multi_reduction <add>, %24, %cst_18 [0] : vector<32x128xf32> to vector<128xf32>
      %26 = vector.shape_cast %25 : vector<128xf32> to vector<1x128xf32>
      %27 = arith.addf %22, %26 : vector<1x128xf32>
      %cst_19 = arith.constant 1.000000e-24 : f32
      %28 = vector.broadcast %cst_19 : f32 to vector<1x128xf32>
      %29 = arith.maximumf %27, %28 : vector<1x128xf32>
      %30 = math.rsqrt %29 : vector<1x128xf32>
      %cst_20 = arith.constant 3.000000e+01 : f32
      %31 = vector.broadcast %cst_20 : f32 to vector<1x128xf32>
      %32 = arith.mulf %31, %30 : vector<1x128xf32>
      %c0_21 = arith.constant 0 : index
      %c0_22 = arith.constant 0 : index
      %33 = vector.load %arg6[%c0_21, %c0_22] : memref<1x128xf32, #tpu.memory_space<vmem>>, vector<1x128xf32>
      tpu.vector_store %arg6[%c0_21, %c0_22], %32 {strides = array<i32>} : memref<1x128xf32, #tpu.memory_space<vmem>>, vector<1x128xf32>,
      %34 = tpu.iota {dimensions = array<i32: 1>} : vector<1x128xi32>
      %c128_i32 = arith.constant 128 : i32
      %35 = arith.muli %arg0, %c128_i32 : i32
      %36 = vector.broadcast %35 : i32 to vector<1x128xi32>
      %37 = arith.addi %34, %36 : vector<1x128xi32>
      %c0_23 = arith.constant 0 : index
      %c0_24 = arith.constant 0 : index
      %38 = vector.load %arg7[%c0_23, %c0_24] : memref<1x128xi32, #tpu.memory_space<vmem>>, vector<1x128xi32>
      tpu.vector_store %arg7[%c0_23, %c0_24], %37 {strides = array<i32>} : memref<1x128xi32, #tpu.memory_space<vmem>>, vector<1x128xi32>,
    } else {
    }
    %c0 = arith.constant 0 : index
    %c0_1 = arith.constant 0 : index
    %3 = vector.load %arg2[%c0, %c0_1] : memref<16x32xf32, #tpu.memory_space<vmem>>, vector<16x32xf32>
    %c0_2 = arith.constant 0 : index
    %c0_3 = arith.constant 0 : index
    %4 = vector.load %arg3[%c0_2, %c0_3] : memref<32x128xf32, #tpu.memory_space<vmem>>, vector<32x128xf32>
    %cst = arith.constant dense<0.000000e+00> : vector<16x128xf32>
    %5 = tpu.matmul %3, %4, %cst {dimension_numbers = #tpu.dot_dimension_numbers<[1], [0], [0], [1], [0, 0, 1, 1], [], []>} : vector<16x32xf32>, vector<32x128xf32>, vector<16x128xf32> -> vector<16x128xf32>
    %c0_4 = arith.constant 0 : index
    %c0_5 = arith.constant 0 : index
    %6 = vector.load %arg6[%c0_4, %c0_5] : memref<1x128xf32, #tpu.memory_space<vmem>>, vector<1x128xf32>
    %7 = vector.broadcast %6 : vector<1x128xf32> to vector<16x128xf32>
    %8 = arith.mulf %5, %7 : vector<16x128xf32>
    %cst_6 = arith.constant -3.000000e+01 : f32
    %cst_7 = arith.constant 3.000000e+01 : f32
    %9 = vector.broadcast %cst_6 : f32 to vector<16x128xf32>
    %10 = arith.maximumf %9, %8 : vector<16x128xf32>
    %11 = vector.broadcast %cst_7 : f32 to vector<16x128xf32>
    %12 = arith.minimumf %11, %10 : vector<16x128xf32>
    %c0_8 = arith.constant 0 : index
    %c0_9 = arith.constant 0 : index
    %13 = vector.load %arg4[%c0_8, %c0_9] : memref<16x1xi32, #tpu.memory_space<vmem>>, vector<16x1xi32>
    %c0_10 = arith.constant 0 : index
    %c0_11 = arith.constant 0 : index
    %14 = vector.load %arg7[%c0_10, %c0_11] : memref<1x128xi32, #tpu.memory_space<vmem>>, vector<1x128xi32>
    %15 = vector.broadcast %14 : vector<1x128xi32> to vector<16x128xi32>
    %16 = vector.broadcast %13 : vector<16x1xi32> to vector<16x128xi32>
    %17 = arith.cmpi eq, %15, %16 : vector<16x128xi32>
    %cst_12 = arith.constant 1.050000e+01 : f32
    %18 = vector.broadcast %cst_12 : f32 to vector<16x128xf32>
    %19 = arith.subf %12, %18 : vector<16x128xf32>
    %20 = arith.select %17, %19, %12 : vector<16x128xi1>, vector<16x128xf32>
    %c0_13 = arith.constant 0 : index
    %c0_14 = arith.constant 0 : index
    %21 = vector.load %arg5[%c0_13, %c0_14] : memref<16x128xf32, #tpu.memory_space<vmem>>, vector<16x128xf32>
    tpu.vector_store %arg5[%c0_13, %c0_14], %20 {strides = array<i32>} : memref<16x128xf32, #tpu.memory_space<vmem>>, vector<16x128xf32>,
    return
  }
  func.func @transform_0(%arg0: i32, %arg1: i32) -> (i32, i32) {
    %c0_i32 = arith.constant 0 : i32
    %c0_i32_0 = arith.constant 0 : i32
    return %arg1, %c0_i32 : i32, i32
  }
  func.func @transform_1(%arg0: i32, %arg1: i32) -> (i32, i32) {
    %c0_i32 = arith.constant 0 : i32
    %c0_i32_0 = arith.constant 0 : i32
    return %c0_i32, %arg0 : i32, i32
  }
  func.func @transform_2(%arg0: i32, %arg1: i32) -> (i32, i32) {
    %c0_i32 = arith.constant 0 : i32
    %c0_i32_0 = arith.constant 0 : i32
    return %arg1, %c0_i32 : i32, i32
  }
  func.func @transform_3(%arg0: i32, %arg1: i32) -> (i32, i32) {
    %c0_i32 = arith.constant 0 : i32
    return %arg1, %arg0 : i32, i32
  }
}

</mosaic_0001>

<llo_original>
// kernel: tpu_custom_call.1
$region0: #{tpu_custom_call.1}
  #allocation0 [shape = 'u32[]', space=smem, size = 0x4, offset = 0x4, fixed_abs, tag = 'smem constant byte address 0x4 - core index']
  #allocation1 [shape = 'u32[144,128]{1,0:T(1,128)}', space=vmem, size = 0x12000, scoped, tag = 'internal scratch']
  #allocation2 [shape = 'f32[1,128]{1,0:T(1,128)}', space=vmem, size = 0x200, scoped, tag = 'scratch operand']
  #allocation3 [shape = 's32[1,128]{1,0:T(1,128)}', space=vmem, size = 0x200, scoped, tag = 'scratch operand']
  %s0 = inlined_call_operand.vmem [shape: f32[16,32], index: 0, kind: input, shape index: {}]
  %s1 = inlined_call_operand.hbm [shape: f32[32,256], index: 1, kind: input, shape index: {}]
  %s2 = inlined_call_operand.vmem [shape: s32[16,1], index: 2, kind: input, shape index: {}]
  %s3 = inlined_call_operand.hbm [shape: f32[16,256], index: 3, kind: output, shape index: {}]
  %s4 = sld [smem:[#allocation0]]
  $region53: #{tpu_custom_call.1} parent=0
    _
  %s6 = ssub.s32 1, %s4
  %s7 = scalar_select 0, %s6, %s4
  $region1: #{tpu_custom_call.1} parent=0
    #allocation4 [shape = 'u8[32768]{0}', space=vmem, size = 0x8000, scoped, tag = 'input window, operand 1']
    #allocation5 [shape = 's32[2]{0}', space=sflag, size = 0x8, scoped, tag = 'scoped memory for tpu_custom_call.1']
    #allocation6 [shape = 's32[2]{0}', space=sflag, size = 0x8, scoped, tag = 'scoped memory for tpu_custom_call.1']
    #allocation7 [shape = 'u8[16384]{0}', space=vmem, size = 0x4000, scoped, tag = 'output window, operand 0']
    %8 = vsyncpa [#allocation5], 0
    %s9 = scalar_lea.sflag [#allocation5], 1
    %10 = vsyncpa %s9, 0
    %11 = vsyncpa [#allocation6], 0
    %s12 = scalar_lea.sflag [#allocation6], 1
    %13 = vsyncpa %s12, 0
    loop: start=0, step=1, limit=4
    $region2: #{tpu_custom_call.1} parent=1 // loop_pre_header
      _
    $region3: #{tpu_custom_call.1} parent=1 // loop_header
      %s15 = sphi 0, %s19
      %p16 = scmp.ge.s32.totalorder %s15, 4
      %s22 = sphi 0, %s34
      %s23 = sphi 0, %s30
      %s24 = sphi 0, %s22
      %s25 = sphi 0, %s23
      %s26 = sphi 0, %s24
      %s27 = sphi 0, %s25
      %s37 = sphi 0, %s39
      %s40 = sphi 0, %s37
      %s41 = sphi 0, %s40
      %s57 = sphi 0, %s41
      %s63 = sphi 0, %s65
      %s66 = sphi 0, %s63
      %s67 = sphi 0, %s66
      %s83 = sphi 0, %s67
      %s89 = sphi 0, %s91
      %s92 = sphi 0, %s89
      %s93 = sphi 0, %s92
      %s109 = sphi 0, %s93
      %s117 = sphi 0, %s119
      %s120 = sphi 0, %s117
      %s121 = sphi 0, %s120
      %s137 = sphi 0, %s121
    $region4: #{tpu_custom_call.1} parent=1 // loop_header_branch
      %18 = sbr.rel (%p16) target = $region8
    $region5: #{tpu_custom_call.1} parent=1 // loop_body
      %s20 = ssub.s32 %s15, 1
      %s21 = ssub.s32 %s15, 2
      %s28 = sadd.s32 1, %s23
      %p29 = scmp.ge.s32.totalorder %s28, 1
      %s30 = scalar_select %p29, 0, %s28
      %s31 = sadd.s32 1, %s22
      %s32 = scalar_select %p29, %s31, %s22
      %p33 = scmp.ge.s32.totalorder %s32, 2
      %s34 = scalar_select %p33, 0, %s32
      %s35 = ssub.s32 %s23, %s30
      %p36 = scmp.eq.s32.totalorder %s35, 0
      %s38 = sadd.s32 %s37, 1
      %s39 = scalar_select %p36, %s37, %s38
      %p42 = pneg %p36
      %p43 = scmp.eq.s32.totalorder %s15, 1
      %p44 = por %p42, %p43
      %p45 = scmp.ne.s32.totalorder %s37, %s40
      %p46 = scmp.eq.s32.totalorder %s15, 0
      %p47 = por %p45, %p46
      %p48 = scmp.ne.s32.totalorder %s37, %s40
      %p49 = scmp.eq.s32.totalorder %s20, 1
      %p50 = por %p48, %p49
      %p51 = scmp.ne.s32.totalorder %s40, %s41
      %p52 = scmp.eq.s32.totalorder %s20, 0
      %p53 = por %p51, %p52
      %p54 = scmp.ne.s32.totalorder %s40, %s41
      %p55 = scmp.eq.s32.totalorder %s21, 1
      %p56 = por %p54, %p55
      %p58 = scmp.ne.s32.totalorder %s41, %s57
      %p59 = scmp.eq.s32.totalorder %s21, 0
      %p60 = por %p58, %p59
      %s61 = ssub.s32 %s22, %s34
      %p62 = scmp.eq.s32.totalorder %s61, 0
      %s64 = sadd.s32 %s63, 1
      %s65 = scalar_select %p62, %s63, %s64
      %p68 = pneg %p62
      %p69 = scmp.eq.s32.totalorder %s15, 1
      %p70 = por %p68, %p69
      %p71 = scmp.ne.s32.totalorder %s63, %s66
      %p72 = scmp.eq.s32.totalorder %s15, 0
      %p73 = por %p71, %p72
      %p74 = scmp.ne.s32.totalorder %s63, %s66
      %p75 = scmp.eq.s32.totalorder %s20, 1
      %p76 = por %p74, %p75
      %p77 = scmp.ne.s32.totalorder %s66, %s67
      %p78 = scmp.eq.s32.totalorder %s20, 0
      %p79 = por %p77, %p78
      %p80 = scmp.ne.s32.totalorder %s66, %s67
      %p81 = scmp.eq.s32.totalorder %s21, 1
      %p82 = por %p80, %p81
      %p84 = scmp.ne.s32.totalorder %s67, %s83
      %p85 = scmp.eq.s32.totalorder %s21, 0
      %p86 = por %p84, %p85
      %s87 = ssub.s32 %s23, %s30
      %p88 = scmp.eq.s32.totalorder %s87, 0
      %s90 = sadd.s32 %s89, 1
      %s91 = scalar_select %p88, %s89, %s90
      %p94 = pneg %p88
      %p95 = scmp.eq.s32.totalorder %s15, 1
      %p96 = por %p94, %p95
      %p97 = scmp.ne.s32.totalorder %s89, %s92
      %p98 = scmp.eq.s32.totalorder %s15, 0
      %p99 = por %p97, %p98
      %p100 = scmp.ne.s32.totalorder %s89, %s92
      %p101 = scmp.eq.s32.totalorder %s20, 1
      %p102 = por %p100, %p101
      %p103 = scmp.ne.s32.totalorder %s92, %s93
      %p104 = scmp.eq.s32.totalorder %s20, 0
      %p105 = por %p103, %p104
      %p106 = scmp.ne.s32.totalorder %s92, %s93
      %p107 = scmp.eq.s32.totalorder %s21, 1
      %p108 = por %p106, %p107
      %p110 = scmp.ne.s32.totalorder %s93, %s109
      %p111 = scmp.eq.s32.totalorder %s21, 0
      %p112 = por %p110, %p111
      %s113 = ssub.s32 %s23, %s30
      %s114 = ssub.s32 %s22, %s34
      %s115 = sor.u32 %s113, %s114
      %p116 = scmp.eq.s32.totalorder %s115, 0
      %s118 = sadd.s32 %s117, 1
      %s119 = scalar_select %p116, %s117, %s118
      %p122 = pneg %p116
      %p123 = scmp.eq.s32.totalorder %s15, 1
      %p124 = por %p122, %p123
      %p125 = scmp.ne.s32.totalorder %s117, %s120
      %p126 = scmp.eq.s32.totalorder %s15, 0
      %p127 = por %p125, %p126
      %p128 = scmp.ne.s32.totalorder %s117, %s120
      %p129 = scmp.eq.s32.totalorder %s20, 1
      %p130 = por %p128, %p129
      %p131 = scmp.ne.s32.totalorder %s120, %s121
      %p132 = scmp.eq.s32.totalorder %s20, 0
      %p133 = por %p131, %p132
      %p134 = scmp.ne.s32.totalorder %s120, %s121
      %p135 = scmp.eq.s32.totalorder %s21, 1
      %p136 = por %p134, %p135
      %p138 = scmp.ne.s32.totalorder %s121, %s137
      %p139 = scmp.eq.s32.totalorder %s21, 0
      %p140 = por %p138, %p139
      %p141 = scmp.le.s32.totalorder 1, %s15
      %p142 = scmp.lt.s32.totalorder %s15, 3
      %p143 = pnand %p141, %p142
      %p144 = pneg %p143
      // Predicated region
      $region9: #{tpu_custom_call.1} parent=5 // pred_check
        _
      $region10: #{tpu_custom_call.1} parent=5 // pred_check_branch
        %146 = sbr.rel (%p143) target = $region12
      $region11: #{tpu_custom_call.1} parent=5 // pred_region
        %s147 = ssub.s32 %s15, 1
        // Predicated region
        $region13: #{tpu_custom_call.1} parent=11 // pred_check
          %p148 = pneg %p53
        $region14: #{tpu_custom_call.1} parent=11 // pred_check_branch
          %150 = sbr.rel (%p148) target = $region16
        $region15: #{tpu_custom_call.1} parent=11 // pred_region
          %s151 = smul.u32 2, %s25
          %p152 = scmp.lt.s32.totalorder %s151, 1
          %s153 = scalar_select %p152, %s151, 1
          %s154 = smul.addr %s153, 8
          %s155 = scalar_lea.vmem %s0, %s154
          %s156 = smul.u32 2, %s25
        $region16: #{tpu_custom_call.1} parent=11 // pred_fallthru
          _
        // Predicated region
        $region17: #{tpu_custom_call.1} parent=11 // pred_check
          %p157 = pneg %p105
        $region18: #{tpu_custom_call.1} parent=11 // pred_check_branch
          %159 = sbr.rel (%p157) target = $region20
        $region19: #{tpu_custom_call.1} parent=11 // pred_region
          %s160 = smul.u32 2, %s25
          %p161 = scmp.lt.s32.totalorder %s160, 1
          %s162 = scalar_select %p161, %s160, 1
          %s163 = smul.addr %s162, 8
          %s164 = scalar_lea.vmem %s2, %s163
          %s165 = smul.u32 2, %s25
        $region20: #{tpu_custom_call.1} parent=11 // pred_fallthru
          _
      $region12: #{tpu_custom_call.1} parent=5 // pred_fallthru
        _
      %p166 = scmp.lt.s32.totalorder %s15, 2
      // Predicated region
      $region21: #{tpu_custom_call.1} parent=5 // pred_check
        %p167 = pneg %p166
      $region22: #{tpu_custom_call.1} parent=5 // pred_check_branch
        %169 = sbr.rel (%p167) target = $region24
      $region23: #{tpu_custom_call.1} parent=5 // pred_region
        // Predicated region
        $region25: #{tpu_custom_call.1} parent=23 // pred_check
          %p170 = pneg %p73
        $region26: #{tpu_custom_call.1} parent=23 // pred_check_branch
          %172 = sbr.rel (%p170) target = $region28
        $region27: #{tpu_custom_call.1} parent=23 // pred_region
          %s173 = sand.u32 %s63, 1
          %s174 = scalar_lea.sflag [#allocation5], %s173
          %s175 = sand.u32 %s63, 1
          %s176 = smul.addr %s175, 32
          %s177 = scalar_lea.vmem [#allocation4], %s176
          %s179 = ssub.s32 512, 512
          %180 = vsyncadd %s174, %s179
          %s181 = smul.addr %s22, 128
          %s182 = scalar_lea.hbm %s1, %s181
          %s183 = sshll.u32 %s177, 4
          %s184 = int_to_ptr.vmem [resolvable:$true] %s183
          %189 = dma.hbm_to_vmem [thread:$0]  %s182, 512, %s184, %s174, 256, 128, 8
        $region28: #{tpu_custom_call.1} parent=23 // pred_fallthru
          _
      $region24: #{tpu_custom_call.1} parent=5 // pred_fallthru
        _
      %p190 = scmp.le.s32.totalorder 1, %s15
      %p191 = scmp.lt.s32.totalorder %s15, 3
      %p192 = pnand %p190, %p191
      %p193 = pneg %p192
      // Predicated region
      $region29: #{tpu_custom_call.1} parent=5 // pred_check
        _
      $region30: #{tpu_custom_call.1} parent=5 // pred_check_branch
        %195 = sbr.rel (%p192) target = $region32
      $region31: #{tpu_custom_call.1} parent=5 // pred_region
        %s196 = ssub.s32 %s15, 1
        %s197 = sand.u32 %s66, 1
        %s198 = scalar_lea.sflag [#allocation5], %s197
        %s199 = sand.u32 %s66, 1
        %s200 = smul.addr %s199, 32
        %s201 = scalar_lea.vmem [#allocation4], %s200
        // Predicated region
        $region33: #{tpu_custom_call.1} parent=31 // pred_check
          %p202 = pneg %p79
        $region34: #{tpu_custom_call.1} parent=31 // pred_check_branch
          %204 = sbr.rel (%p202) target = $region36
        $region35: #{tpu_custom_call.1} parent=31 // pred_region
          %205 = dma.done %s198, 512
        $region36: #{tpu_custom_call.1} parent=31 // pred_fallthru
          _
        %s206 = smul.u32 2, %s25
        %p207 = scmp.lt.s32.totalorder %s206, 1
        %s208 = scalar_select %p207, %s206, 1
        %s209 = smul.addr %s208, 8
        %s210 = scalar_lea.vmem %s0, %s209
        %p211 = pneg %p53
        %p212 = pneg %p50
        %s213 = sand.u32 %s66, 1
        %s214 = scalar_lea.sflag [#allocation5], %s213
        %s215 = sand.u32 %s66, 1
        %s216 = smul.addr %s215, 32
        %s217 = scalar_lea.vmem [#allocation4], %s216
        %p218 = pneg %p79
        %p219 = pneg %p76
        %s220 = smul.u32 2, %s25
        %p221 = scmp.lt.s32.totalorder %s220, 1
        %s222 = scalar_select %p221, %s220, 1
        %s223 = smul.addr %s222, 8
        %s224 = scalar_lea.vmem %s2, %s223
        %p225 = pneg %p105
        %p226 = pneg %p102
        %p227 = pneg %p133
        %p228 = pneg %p130
        %s229 = sand.u32 %s120, 1
        %s230 = scalar_lea.sflag [#allocation6], %s229
        %s231 = sand.u32 %s120, 1
        %s232 = smul.addr %s231, 16
        %s233 = scalar_lea.vmem [#allocation7], %s232
        %s234 = smul.u32 2, %s25
        %p235 = scmp.lt.s32.totalorder %s234, 1
        %s236 = scalar_select %p235, %s234, 1
        %s237 = smul.addr %s236, 8
        %s238 = scalar_lea.vmem %s0, %s237
        %s239 = smul.u32 2, %s25
        %s240 = smul.u32 2, %s25
        %p241 = scmp.lt.s32.totalorder %s240, 1
        %s242 = scalar_select %p241, %s240, 1
        %s243 = smul.addr %s242, 8
        %s244 = scalar_lea.vmem %s2, %s243
        %s245 = smul.u32 2, %s25
        %s246 = smul.u32 2, %s25
        %p247 = scmp.eq.s32.totalorder %s25, 0
        // Predicated region
        $region37: #{tpu_custom_call.1} parent=31 // pred_check
          %p248 = pneg %p247
        $region38: #{tpu_custom_call.1} parent=31 // pred_check_branch
          %250 = sbr.rel (%p248) target = $region40
        $region39: #{tpu_custom_call.1} parent=31 // pred_region
          %v251 = vld [vmem:[%s201] sm:$0xff]
          %v252 = vld [vmem:[%s201 + $0x8] sm:$0xff]
          %v253 = vld [vmem:[%s201 + $0x10] sm:$0xff]
          %v254 = vld [vmem:[%s201 + $0x18] sm:$0xff]
          %v255 = vmul.f32 %v251, %v251
          %v256 = vmul.f32 %v252, %v252
          %v257 = vmul.f32 %v253, %v253
          %v258 = vmul.f32 %v254, %v254
          %v259 = vadd.f32 %v255, %v256
          %v260 = vadd.f32 %v259, %v257
          %v261 = vadd.f32 %v260, %v258
          %v262 = vrot.slane %v261, 4
          %v263 = vadd.f32 %v261, %v262
          %v264 = vrot.slane %v263, 2
          %v265 = vadd.f32 %v263, %v264
          %v266 = vrot.slane %v265, 1
          %v267 = vadd.f32 %v265, %v266
          %v268 = vadd.f32 %v267, 0.0
          %v269 = vmax.f32 %v268, 1e-24
          %v270 = vrsqrt.pop %v269
          %v271 = vmul.f32 %v270, 30.0
          %272 = vst [vmem:[#allocation2] sm:$0x1] %v271
          %v273 = vlaneseq
          %v274 = vand.u32 %v273, 127
          %s275 = smul.u32 %s24, 128
          %v276 = vstv %s275
          %v277 = vadd.s32 %v274, %v276
          %278 = vst [vmem:[#allocation3] sm:$0x1] %v277
        $region40: #{tpu_custom_call.1} parent=31 // pred_fallthru
          _
        %v279 = vld [vmem:[%s238] sm:$0xff]
        %v280 = vld [vmem:[%s238 + $0x8] sm:$0xff]
        %v281 = vld [vmem:[%s201] sm:$0xff]
        %v282 = vld [vmem:[%s201 + $0x8] sm:$0xff]
        %v283 = vld [vmem:[%s201 + $0x10] sm:$0xff]
        %v284 = vld [vmem:[%s201 + $0x18] sm:$0xff]
        %vm285 = vcmask 261120
        %v287 = vsel %vm285, %v279, 0
        %v290 = vsel %vm285, %v280, 0
        %292 = vmatprep.subr.mxu0 0.0
        %293 = vmatpush1.msra.mxu0 %v281
        %294 = vmatprep.subr.mxu0 0.0
        %295 = vmatpush1.msra.mxu0 %v282
        %296 = vmatprep.subr.mxu0 0.0
        %297 = vmatpush1.msra.mxu0 %v283
        %298 = vmatprep.subr.mxu0 0.0
        %299 = vmatpush1.msra.mxu0 %v284
        %300 = vmatprep.subr.mxu0 0.0
        %301 = vmatpush1.msra.mxu0 0.0
        %302 = vmatprep.subr.mxu0 0.0
        %303 = vmatpush1.msra.mxu0 0.0
        %304 = vmatprep.subr.mxu0 0.0
        %305 = vmatpush1.msra.mxu0 0.0
        %306 = vmatprep.subr.mxu0 0.0
        %307 = vmatpush1.msra.mxu0 0.0
        %308 = vmatprep.subr.mxu0 0.0
        %309 = vmatpush1.msra.mxu0 0.0
        %310 = vmatprep.subr.mxu0 0.0
        %311 = vmatpush1.msra.mxu0 0.0
        %312 = vmatprep.subr.mxu0 0.0
        %313 = vmatpush1.msra.mxu0 0.0
        %314 = vmatprep.subr.mxu0 0.0
        %315 = vmatpush1.msra.mxu0 0.0
        %316 = vmatprep.subr.mxu0 0.0
        %317 = vmatpush1.msra.mxu0 0.0
        %318 = vmatprep.subr.mxu0 0.0
        %319 = vmatpush1.msra.mxu0 0.0
        %320 = vmatprep.subr.mxu0 0.0
        %321 = vmatpush1.msra.mxu0 0.0
        %322 = vmatprep.subr.mxu0 0.0
        %323 = vmatpush1.msra.mxu0 0.0
        %324 = vmatprep.subr.mxu0 0.0
        %325 = vmatpush1.msra.mxu0 0.0
        %326 = vmatprep.subr.mxu0 0.0
        %327 = vmatpush1.msra.mxu0 0.0
        %328 = vmatprep.subr.mxu0 0.0
        %329 = vmatpush1.msra.mxu0 0.0
        %330 = vmatprep.subr.mxu0 0.0
        %331 = vmatpush1.msra.mxu0 0.0
        %332 = vmatprep.subr.mxu0 0.0
        %333 = vmatpush1.msra.mxu0 0.0
        %334 = vmatprep.subr.mxu0 0.0
        %335 = vmatpush1.msra.mxu0 0.0
        %336 = vmatprep.subr.mxu0 0.0
        %337 = vmatpush1.msra.mxu0 0.0
        %338 = vmatprep.subr.mxu0 0.0
        %339 = vmatpush1.msra.mxu0 0.0
        %340 = vmatprep.subr.mxu0 0.0
        %341 = vmatpush1.msra.mxu0 0.0
        %342 = vmatprep.subr.mxu0 0.0
        %343 = vmatpush1.msra.mxu0 0.0
        %344 = vmatprep.subr.mxu0 0.0
        %345 = vmatpush1.msra.mxu0 0.0
        %346 = vmatprep.subr.mxu0 0.0
        %347 = vmatpush1.msra.mxu0 0.0
        %348 = vmatprep.subr.mxu0 0.0
        %349 = vmatpush1.msra.mxu0 0.0
        %350 = vmatprep.subr.mxu0 0.0
        %351 = vmatpush1.msra.mxu0 0.0
        %352 = vmatprep.subr.mxu0 0.0
        %353 = vmatpush1.msra.mxu0 0.0
        %354 = vmatprep.subr.mxu0 0.0
        %355 = vmatpush1.msra.mxu0 0.0
        %356 = vmatprep.mubr.f32.mxu0 0.0
        %357 = vmatmul.mubr.f32.gmra.mrb[0].mxu0 %v287
        %v358 = vpop.f32.mrb[0].mxu0
        %v359 = vadd.f32 0.0, %v358
        %v360 = vpop.f32.mrb[0].mxu0
        %361 = vmatprep.mubr.f32.mxu0 0.0
        %362 = vmatmul.mubr.f32.gmra.mrb[0].mxu0 %v290
        %v363 = vpop.f32.mrb[0].mxu0
        %v364 = vadd.f32 0.0, %v363
        %v365 = vpop.f32.mrb[0].mxu0
        %366 = vdwg.mxu0
        %v367 = vld [vmem:[#allocation2] sm:$0x1]
        %v369 = vlaneseq
        %v370 = vshrl.u32 %v369, 7
        %v371 = vsub.s32 0, %v370
        %v372 = vrot.slane %v367, %v371
        %v374 = vmul.f32 %v359, %v372
        %v375 = vmul.f32 %v364, %v372
        %v376 = vmax.f32 %v374, -30.0
        %v377 = vmax.f32 %v375, -30.0
        %v378 = vmin.f32 %v376, 30.0
        %v379 = vmin.f32 %v377, 30.0
        %v380 = vld [vmem:[%s244] sm:$0xff]
        %v381 = vld [vmem:[%s244 + $0x8] sm:$0xff]
        %v382 = vld [vmem:[#allocation3] sm:$0x1]
        %v383 = vlaneseq
        %v384 = vshrl.u32 %v383, 7
        %v385 = vsub.s32 0, %v384
        %v386 = vrot.slane %v382, %v385
        %387 = vset.pattern.permute.xlu0 0
        %388 = vperm.xlu0 %387, %v380
        %v389 = vpop.permute.xlu0 %388
        %390 = vset.pattern.permute.xlu0 0
        %391 = vperm.xlu0 %390, %v381
        %v392 = vpop.permute.xlu0 %391
        %vm393 = vcmp.eq.s32.totalorder %v386, %v389
        %vm394 = vcmp.eq.s32.totalorder %v386, %v392
        %v395 = vsub.f32 %v378, 10.5
        %v396 = vsub.f32 %v379, 10.5
        %v397 = vsel %vm393, %v395, %v378
        %v398 = vsel %vm394, %v396, %v379
        %399 = vst [vmem:[%s233] sm:$0xff] %v397
        %400 = vst [vmem:[%s233 + $0x8] sm:$0xff] %v398
        %s401 = sand.u32 %s120, 1
        %s402 = scalar_lea.sflag [#allocation6], %s401
        %s403 = sand.u32 %s120, 1
        %s404 = smul.addr %s403, 16
        %s405 = scalar_lea.vmem [#allocation7], %s404
        // Predicated region
        $region41: #{tpu_custom_call.1} parent=31 // pred_check
          %p406 = pneg %p130
        $region42: #{tpu_custom_call.1} parent=31 // pred_check_branch
          %408 = sbr.rel (%p406) target = $region44
        $region43: #{tpu_custom_call.1} parent=31 // pred_region
          %s409 = smul.u32 2, %s25
          %s411 = ssub.s32 256, 256
          %412 = vsyncadd %s402, %s411
          %s413 = smul.addr %s409, 2
          %s414 = sadd.s32 %s24, %s413
          %s415 = smul.addr %s414, 128
          %s416 = scalar_lea.hbm %s3, %s415
          %s417 = sshll.u32 %s405, 4
          %s418 = int_to_ptr.vmem [resolvable:$true] %s417
          %423 = dma.vmem_to_hbm [thread:$0]  %s418, 256, %s416, %s402, 128, 256, 8
        $region44: #{tpu_custom_call.1} parent=31 // pred_fallthru
          _
      $region32: #{tpu_custom_call.1} parent=5 // pred_fallthru
        _
      %p424 = scmp.le.s32.totalorder 2, %s15
      // Predicated region
      $region45: #{tpu_custom_call.1} parent=5 // pred_check
        %p425 = pneg %p424
      $region46: #{tpu_custom_call.1} parent=5 // pred_check_branch
        %427 = sbr.rel (%p425) target = $region48
      $region47: #{tpu_custom_call.1} parent=5 // pred_region
        %s428 = ssub.s32 %s15, 2
        // Predicated region
        $region49: #{tpu_custom_call.1} parent=47 // pred_check
          %p429 = pneg %p136
        $region50: #{tpu_custom_call.1} parent=47 // pred_check_branch
          %431 = sbr.rel (%p429) target = $region52
        $region51: #{tpu_custom_call.1} parent=47 // pred_region
          %s432 = sand.u32 %s121, 1
          %s433 = scalar_lea.sflag [#allocation6], %s432
          %s434 = sand.u32 %s121, 1
          %s435 = smul.addr %s434, 16
          %s436 = scalar_lea.vmem [#allocation7], %s435
          %437 = dma.done %s433, 256
        $region52: #{tpu_custom_call.1} parent=47 // pred_fallthru
          _
      $region48: #{tpu_custom_call.1} parent=5 // pred_fallthru
        _
    $region6: #{tpu_custom_call.1} parent=1 // loop_footer
      %s19 = sadd.s32 1, %s15
    $region7: #{tpu_custom_call.1} parent=1 // loop_footer_branch
      %14 = sbr.rel target = $region3
    $region8: #{tpu_custom_call.1} parent=1 // loop_exit
      _
    %438 = vsyncpa [#allocation5], 1
    %s439 = scalar_lea.sflag [#allocation5], 1
    %440 = vsyncpa %s439, 1
    %441 = vsyncpa [#allocation6], 1
    %s442 = scalar_lea.sflag [#allocation6], 1
    %443 = vsyncpa %s442, 1

</llo_original>
